<compile_context>
chip_gen: v6e
topology: v6e:2x2x1
jax: 0.10.0
libtpu: 0.0.40
codegen_flags: <defaults>
</compile_context>

<pallas_src>
import functools
import math

import jax
import jax.numpy as jnp
from jax import lax
from jax.experimental import pallas as pl
from jax.experimental.pallas import tpu as pltpu


# ---------------------------------------------------------------------------
# VMEM budget helpers (generation-aware: v7x only has 64 MiB / TensorCore)
# ---------------------------------------------------------------------------
def _vmem_cap_bytes():
    try:
        return int(0.6 * pltpu.get_tpu_info().vmem_capacity_bytes)
    except Exception:                      # unknown chip / interpret mode
        return 48 << 20


def _vmem_limit(need_bytes):
    return int(min(_vmem_cap_bytes(), max(32 << 20, 2 * int(need_bytes))))


def _round_up(n, m):
    return ((n + m - 1) // m) * m


# ---------------------------------------------------------------------------
# SeriesDecomposition (Pallas kernel)
# ---------------------------------------------------------------------------
def _pick_group(k):
    """Largest divisor of k that is <= isqrt(k); g=1 degenerates to the direct sum."""
    g = max(1, math.isqrt(k))
    while g > 1 and k % g:
        g -= 1
    return g


def _pick_width_tile(W, L, kernel_size, group, pad_top, itemsize):
    """Lane-dense column tile (multiple of 128 dividing W) that keeps the per-step
    VMEM footprint modest; falls back to the full width for small / odd W."""
    if W % 128 != 0:
        return W
    H = L + 2 * pad_top
    Lp = L + kernel_size - group

    def need(wt):
        return 3 * 2 * L * wt * itemsize + (H + Lp) * wt * 4

    for wt in (512, 384, 256, 128):
        if W % wt == 0 and (need(wt) <= (24 << 20) or wt == 128):
            return wt
    return W


def _decomp_kernel(x_ref, seasonal_ref, trend_ref, xpad_ref, psum_ref, *,
                   kernel_size, group, pad, pad_top, seq_len):
    """One (L, Wt) column-tile per grid step (every column = independent series).

    x_ref:        (L, Wt)                      unpadded input block
    seasonal_ref: (L, Wt)
    trend_ref:    (L, Wt)
    xpad_ref:     (L + 2*pad_top, Wt) f32      x copied at a sublane-aligned row
                  offset; its zero pad rows realize AvgPool1d's zero padding
                  (count_include_pad=True) for free.
    psum_ref:     (L + kernel_size - group, Wt) f32 group-tap partial sums; written
                  exactly once with an aligned full store (all shifts on the reads).
    """
    L = seq_len
    ng = kernel_size // group
    off = pad_top - pad                       # static, >= 0
    Lp = L + kernel_size - group
    H = xpad_ref.shape[0]
    Wt = xpad_ref.shape[1]

    xf = x_ref[...].astype(jnp.float32)       # hoisted: loaded & cast exactly once

    # Zero only the pad rows (cheap, mostly-aligned stores), then place x at row
    # `pad_top` (multiple of 8) so the big copy is a full aligned store.
    if pad_top > 0:
        xpad_ref[0:pad_top, :] = jnp.zeros((pad_top, Wt), jnp.float32)
    if H - pad_top - L > 0:
        xpad_ref[pad_top + L:H, :] = jnp.zeros((H - pad_top - L, Wt), jnp.float32)
    xpad_ref[pad_top:pad_top + L, :] = xf

    # Stage 1: `group`-tap partial sums accumulated in registers from shifted reads
    # of the padded scratch; single aligned store.  psum[u] = sum_{j<g} x_zp[u + j].
    acc1 = xpad_ref[off:off + Lp, :]
    for j in range(1, group):
        acc1 = acc1 + xpad_ref[off + j:off + j + Lp, :]
    psum_ref[...] = acc1

    # Stage 2: combine ng shifted partial sums -> full kernel_size-tap window sum.
    acc = psum_ref[0:L, :]
    for m in range(1, ng):
        acc = acc + psum_ref[group * m:group * m + L, :]

    trend = acc * (1.0 / kernel_size)
    trend_ref[...] = trend.astype(trend_ref.dtype)
    seasonal_ref[...] = (xf - trend).astype(seasonal_ref.dtype)


def series_decomposition(x, kernel_size=25):
    """x: (L, B, C) time-major -> (seasonal, trend), both (L, B, C).

    Matches nn.AvgPool1d(kernel_size, stride=1, padding=kernel_size//2) along time
    (zero padding, count_include_pad=True), i.e. the SeriesDecomposition module in
    the PyTorch spec.  The (L, B*C) view is a free contiguous reshape: the kernel's
    last dim is lane-dense (multiple of 128) whenever B*C % 128 == 0.
    """
    assert kernel_size % 2 == 1, "even kernel_size changes the PyTorch output length"
    L, B, C = x.shape
    W = B * C
    pad = kernel_size // 2
    group = _pick_group(kernel_size)
    pad_top = _round_up(pad, 8)               # sublane-aligned placement of x
    itemsize = jnp.dtype(x.dtype).itemsize
    wt = _pick_width_tile(W, L, kernel_size, group, pad_top, itemsize)
    n_w = W // wt
    Lp = L + kernel_size - group
    H = L + 2 * pad_top

    x2 = x.reshape(L, W)                      # contiguous: no data movement
    kern = functools.partial(_decomp_kernel, kernel_size=kernel_size, group=group,
                             pad=pad, pad_top=pad_top, seq_len=L)

    need = 3 * 2 * L * wt * itemsize + (H + Lp) * wt * 4

    seasonal2, trend2 = pl.pallas_call(
        kern,
        out_shape=(jax.ShapeDtypeStruct((L, W), x.dtype),
                   jax.ShapeDtypeStruct((L, W), x.dtype)),
        grid_spec=pltpu.PrefetchScalarGridSpec(
            num_scalar_prefetch=0,
            grid=(n_w,),
            in_specs=[pl.BlockSpec((L, wt), lambda i: (0, i))],
            out_specs=[pl.BlockSpec((L, wt), lambda i: (0, i)),
                       pl.BlockSpec((L, wt), lambda i: (0, i))],
            scratch_shapes=[pltpu.VMEM((H, wt), jnp.float32),
                            pltpu.VMEM((Lp, wt), jnp.float32)],
        ),
        compiler_params=pltpu.CompilerParams(
            dimension_semantics=("parallel",),
            vmem_limit_bytes=_vmem_limit(need)),
    )(x2)
    return seasonal2.reshape(L, B, C), trend2.reshape(L, B, C)


# ---------------------------------------------------------------------------
# Fused residual-add + LayerNorm (+ optional extra residual) (Pallas kernel)
# ---------------------------------------------------------------------------
def _add_ln_kernel(*refs, eps, has_res):
    if has_res:
        x_ref, y_ref, r_ref, g_ref, b_ref, o_ref = refs
    else:
        x_ref, y_ref, g_ref, b_ref, o_ref = refs
        r_ref = None
    v = x_ref[...].astype(jnp.float32) + y_ref[...].astype(jnp.float32)   # (Rt, D)
    mu = jnp.mean(v, axis=-1, keepdims=True)
    c = v - mu
    var = jnp.mean(c * c, axis=-1, keepdims=True)
    out = c * lax.rsqrt(var + eps) * g_ref[...] + b_ref[...]
    if has_res:
        out = out + r_ref[...].astype(jnp.float32)
    o_ref[...] = out.astype(o_ref.dtype)


def _pick_row_tile(R):
    if R <= 2048:
        return R                               # one fat block (overhead-bound sizes)
    for t in (2048, 1024, 512, 256, 128):
        if R % t == 0:
            return t
    return R


def _add_layernorm_impl(x, y, r, gamma, beta, eps):
    """LayerNorm(x + y) (+ r if given) over the feature dim on the flattened
    (L*B, D) row view — fat row tiles, explicit VMEM budget."""
    L, B, D = x.shape
    R = L * B
    rt = _pick_row_tile(R)
    n_r = R // rt
    row_spec = pl.BlockSpec((rt, D), lambda i: (i, 0))
    vec_spec = pl.BlockSpec((1, D), lambda i: (0, 0))

    ins = [x.reshape(R, D), y.reshape(R, D)]
    in_specs = [row_spec, row_spec]
    if r is not None:
        ins.append(r.reshape(R, D))
        in_specs.append(row_spec)
    ins += [gamma.reshape(1, D).astype(jnp.float32),
            beta.reshape(1, D).astype(jnp.float32)]
    in_specs += [vec_spec, vec_spec]

    itemsize = max(jnp.dtype(x.dtype).itemsize, 4)
    need = (len(ins) + 1) * 2 * rt * D * itemsize
    kern = functools.partial(_add_ln_kernel, eps=eps, has_res=r is not None)

    out2 = pl.pallas_call(
        kern,
        out_shape=jax.ShapeDtypeStruct((R, D), x.dtype),
        grid_spec=pltpu.PrefetchScalarGridSpec(
            num_scalar_prefetch=0,
            grid=(n_r,),
            in_specs=in_specs,
            out_specs=row_spec,
        ),
        compiler_params=pltpu.CompilerParams(
            dimension_semantics=("parallel",),
            vmem_limit_bytes=_vmem_limit(need)),
    )(*ins)
    return out2.reshape(L, B, D)


def add_layernorm(x, y, gamma, beta, eps=1e-5):
    """LayerNorm(x + y) over the last dim (fused residual add + norm)."""
    return _add_layernorm_impl(x, y, None, gamma, beta, eps)


def add_layernorm_plus(x, y, resid, gamma, beta, eps=1e-5):
    """LayerNorm(x + y) + resid, fused (saves one HBM pass per encoder layer)."""
    return _add_layernorm_impl(x, y, resid, gamma, beta, eps)


# ---------------------------------------------------------------------------
# Rest of the model (plain JAX glue; matmuls run on the MXU via XLA)
# ---------------------------------------------------------------------------
def linear(x, w, b):
    return jnp.dot(x, w, preferred_element_type=jnp.float32) + b


def multi_head_attention(x, p, num_heads):
    # TODO(synk): attention runs as XLA einsums on the MXU, not hand-written Pallas.
    L, B, D = x.shape
    hd = D // num_heads
    scale = 1.0 / math.sqrt(hd)
    qkv = linear(x, p["w_qkv"], p["b_qkv"])                  # fused (D, 3D) GEMM
    q, k, v = jnp.split(qkv, 3, axis=-1)
    q = q.reshape(L, B, num_heads, hd)
    k = k.reshape(L, B, num_heads, hd)
    v = v.reshape(L, B, num_heads, hd)
    scores = jnp.einsum("qbhd,kbhd->bhqk", q, k,
                        preferred_element_type=jnp.float32) * scale
    attn = jax.nn.softmax(scores, axis=-1)
    out = jnp.einsum("bhqk,kbhd->qbhd", attn, v,
                     preferred_element_type=jnp.float32).reshape(L, B, D)
    return linear(out, p["wo"], p["bo"])


def encoder_layer(h, p, num_heads=4):
    # h: (L, B, D) time-major.  Dropout layers are identity at inference time.
    seasonal, trend = series_decomposition(h, kernel_size=25)
    attn = multi_head_attention(seasonal, p["attn"], num_heads)
    x = add_layernorm(seasonal, attn, p["ln_g"], p["ln_b"])
    ff = linear(jax.nn.relu(linear(x, p["w1"], p["b1"])), p["w2"], p["b2"])
    # Fused: LayerNorm(x + ff) + trend  (same LayerNorm params reused, as in PyTorch).
    return add_layernorm_plus(x, ff, trend, p["ln_g"], p["ln_b"])


def autoformer_forward(x, params, forecast_steps=10):
    h = linear(x, params["emb_w"], params["emb_b"])          # (B, L, D)
    h = jnp.transpose(h, (1, 0, 2))                          # time-major (L, B, D)
    for lp in params["layers"]:
        h = encoder_layer(h, lp)
    h = h[-forecast_steps:]                                  # slice BEFORE projecting
    out = linear(h, params["proj_w"], params["proj_b"])      # (F, B, 1)
    return jnp.transpose(out, (1, 0, 2))                     # (B, F, 1)


def init_params(key, input_dim, d_model=64, d_ff=128, num_layers=2):
    def dense(k, fan_in, fan_out):
        kw, kb = jax.random.split(k)
        lim = 1.0 / math.sqrt(fan_in)
        w = jax.random.uniform(kw, (fan_in, fan_out), jnp.float32, -lim, lim)
        b = jax.random.uniform(kb, (fan_out,), jnp.float32, -lim, lim)
        return w, b

    keys = jax.random.split(key, 2 + num_layers)
    emb_w, emb_b = dense(keys[0], input_dim, d_model)
    proj_w, proj_b = dense(keys[1], d_model, 1)
    layers = []
    for i in range(num_layers):
        k = jax.random.split(keys[2 + i], 6)
        wq, bq = dense(k[0], d_model, d_model)
        wk, bk = dense(k[1], d_model, d_model)
        wv, bv = dense(k[2], d_model, d_model)
        wo, bo = dense(k[3], d_model, d_model)
        w1, b1 = dense(k[4], d_model, d_ff)
        w2, b2 = dense(k[5], d_ff, d_model)
        layers.append(dict(
            attn=dict(w_qkv=jnp.concatenate([wq, wk, wv], axis=1),
                      b_qkv=jnp.concatenate([bq, bk, bv]),
                      wo=wo, bo=bo),
            w1=w1, b1=b1, w2=w2, b2=b2,
            ln_g=jnp.ones((d_model,), jnp.float32),
            ln_b=jnp.zeros((d_model,), jnp.float32)))
    return dict(emb_w=emb_w, emb_b=emb_b, proj_w=proj_w, proj_b=proj_b, layers=layers)


# ---------------------------------------------------------------------------
# Pure-JAX references for the Pallas kernels
# ---------------------------------------------------------------------------
def _decomp_reference(x_tm, kernel_size=25):
    """x_tm: (L, B, C) time-major; zero padding, count_include_pad=True."""
    pad = kernel_size // 2
    xp = jnp.pad(x_tm, ((pad, pad), (0, 0), (0, 0)))
    L = x_tm.shape[0]
    windows = jnp.stack([xp[j:j + L] for j in range(kernel_size)], axis=0)
    trend = windows.mean(axis=0)
    return x_tm - trend, trend


def _ln_reference(v, g, b, eps=1e-5):
    mu = v.mean(-1, keepdims=True)
    var = ((v - mu) ** 2).mean(-1, keepdims=True)
    return (v - mu) / jnp.sqrt(var + eps) * g + b


if __name__ == "__main__":
    key = jax.random.PRNGKey(0)
    k_x, k_p = jax.random.split(key)

    # Small shapes consistent with the module defaults.
    B, L, input_dim = 2, 24, 7
    d_model, d_ff, num_layers, forecast_steps = 64, 128, 2, 10

    x = jax.random.normal(k_x, (B, L, input_dim), dtype=jnp.float32)
    params = init_params(k_p, input_dim, d_model, d_ff, num_layers)

    # --- unit check: series decomposition kernel vs reference (time-major) ------
    xe = linear(x, params["emb_w"], params["emb_b"])           # (B, L, D)
    xt = jnp.transpose(xe, (1, 0, 2))                          # (L, B, D)
    seasonal, trend = series_decomposition(xt)
    jax.block_until_ready((seasonal, trend))
    sea_ref, trend_ref = _decomp_reference(xt)
    assert jnp.allclose(trend, trend_ref, atol=1e-5, rtol=1e-5)
    assert jnp.allclose(seasonal, sea_ref, atol=1e-5, rtol=1e-5)
    assert jnp.allclose(seasonal + trend, xt, atol=1e-5, rtol=1e-5)

    # --- unit check: fused residual-add + LayerNorm (+ residual) kernels --------
    g0 = params["layers"][0]["ln_g"]
    b0 = params["layers"][0]["ln_b"]
    ln = add_layernorm(seasonal, trend, g0, b0)
    jax.block_until_ready(ln)
    ln_ref = _ln_reference(seasonal + trend, g0, b0)
    assert jnp.allclose(ln, ln_ref, atol=1e-5, rtol=1e-5)

    lnp_out = add_layernorm_plus(seasonal, trend, xt, g0, b0)
    jax.block_until_ready(lnp_out)
    assert jnp.allclose(lnp_out, ln_ref + xt, atol=1e-5, rtol=1e-5)

    # --- full model forward -------------------------------------------------------
    fwd = jax.jit(functools.partial(autoformer_forward, forecast_steps=forecast_steps))
    out = fwd(x, params)
    jax.block_until_ready(out)
    assert out.shape == (B, forecast_steps, 1)
    assert bool(jnp.all(jnp.isfinite(out)))

    print("KERNEL_OK")
</pallas_src>

<mosaic_0001>
module attributes {stable_mosaic.version = 11 : i64} {
  func.func @_decomp_kernel(%arg0: i32, %arg1: memref<24x128xf32, #tpu.memory_space<vmem>>, %arg2: memref<24x128xf32, #tpu.memory_space<vmem>>, %arg3: memref<24x128xf32, #tpu.memory_space<vmem>>, %arg4: memref<56x128xf32, #tpu.memory_space<vmem>>, %arg5: memref<44x128xf32, #tpu.memory_space<vmem>>) attributes {dimension_semantics = [#tpu.dimension_semantics<parallel>], iteration_bounds = array<i64: 1>, scalar_prefetch = 0 : i64, scratch_operands = 2 : i64, tpu.core_type = #tpu.core_type<tc>, window_params = [{transform_indices = @transform_0, window_bounds = array<i64: 24, 128>}, {transform_indices = @transform_1, window_bounds = array<i64: 24, 128>}, {transform_indices = @transform_2, window_bounds = array<i64: 24, 128>}]} {
    %c0 = arith.constant 0 : index
    %c0_0 = arith.constant 0 : index
    %0 = vector.load %arg1[%c0, %c0_0] : memref<24x128xf32, #tpu.memory_space<vmem>>, vector<24x128xf32>
    %cst = arith.constant 0.000000e+00 : f32
    %1 = vector.broadcast %cst : f32 to vector<16x128xf32>
    %c0_1 = arith.constant 0 : index
    %c0_2 = arith.constant 0 : index
    %2 = vector.load %arg4[%c0_1, %c0_2] : memref<56x128xf32, #tpu.memory_space<vmem>>, vector<16x128xf32>
    tpu.vector_store %arg4[%c0_1, %c0_2], %1 {strides = array<i32>} : memref<56x128xf32, #tpu.memory_space<vmem>>, vector<16x128xf32>,
    %cst_3 = arith.constant 0.000000e+00 : f32
    %3 = vector.broadcast %cst_3 : f32 to vector<16x128xf32>
    %c40 = arith.constant 40 : index
    %c0_4 = arith.constant 0 : index
    %4 = vector.load %arg4[%c40, %c0_4] : memref<56x128xf32, #tpu.memory_space<vmem>>, vector<16x128xf32>
    tpu.vector_store %arg4[%c40, %c0_4], %3 {strides = array<i32>} : memref<56x128xf32, #tpu.memory_space<vmem>>, vector<16x128xf32>,
    %c16 = arith.constant 16 : index
    %c0_5 = arith.constant 0 : index
    %5 = vector.load %arg4[%c16, %c0_5] : memref<56x128xf32, #tpu.memory_space<vmem>>, vector<24x128xf32>
    tpu.vector_store %arg4[%c16, %c0_5], %0 {strides = array<i32>} : memref<56x128xf32, #tpu.memory_space<vmem>>, vector<24x128xf32>,
    %c4 = arith.constant 4 : index
    %c0_6 = arith.constant 0 : index
    %6 = vector.load %arg4[%c4, %c0_6] : memref<56x128xf32, #tpu.memory_space<vmem>>, vector<44x128xf32>
    %c5 = arith.constant 5 : index
    %c0_7 = arith.constant 0 : index
    %7 = vector.load %arg4[%c5, %c0_7] : memref<56x128xf32, #tpu.memory_space<vmem>>, vector<44x128xf32>
    %8 = arith.addf %6, %7 : vector<44x128xf32>
    %c6 = arith.constant 6 : index
    %c0_8 = arith.constant 0 : index
    %9 = vector.load %arg4[%c6, %c0_8] : memref<56x128xf32, #tpu.memory_space<vmem>>, vector<44x128xf32>
    %10 = arith.addf %8, %9 : vector<44x128xf32>
    %c7 = arith.constant 7 : index
    %c0_9 = arith.constant 0 : index
    %11 = vector.load %arg4[%c7, %c0_9] : memref<56x128xf32, #tpu.memory_space<vmem>>, vector<44x128xf32>
    %12 = arith.addf %10, %11 : vector<44x128xf32>
    %c8 = arith.constant 8 : index
    %c0_10 = arith.constant 0 : index
    %13 = vector.load %arg4[%c8, %c0_10] : memref<56x128xf32, #tpu.memory_space<vmem>>, vector<44x128xf32>
    %14 = arith.addf %12, %13 : vector<44x128xf32>
    %c0_11 = arith.constant 0 : index
    %c0_12 = arith.constant 0 : index
    %15 = vector.load %arg5[%c0_11, %c0_12] : memref<44x128xf32, #tpu.memory_space<vmem>>, vector<44x128xf32>
    tpu.vector_store %arg5[%c0_11, %c0_12], %14 {strides = array<i32>} : memref<44x128xf32, #tpu.memory_space<vmem>>, vector<44x128xf32>,
    %c0_13 = arith.constant 0 : index
    %c0_14 = arith.constant 0 : index
    %16 = vector.load %arg5[%c0_13, %c0_14] : memref<44x128xf32, #tpu.memory_space<vmem>>, vector<24x128xf32>
    %c5_15 = arith.constant 5 : index
    %c0_16 = arith.constant 0 : index
    %17 = vector.load %arg5[%c5_15, %c0_16] : memref<44x128xf32, #tpu.memory_space<vmem>>, vector<24x128xf32>
    %18 = arith.addf %16, %17 : vector<24x128xf32>
    %c10 = arith.constant 10 : index
    %c0_17 = arith.constant 0 : index
    %19 = vector.load %arg5[%c10, %c0_17] : memref<44x128xf32, #tpu.memory_space<vmem>>, vector<24x128xf32>
    %20 = arith.addf %18, %19 : vector<24x128xf32>
    %c15 = arith.constant 15 : index
    %c0_18 = arith.constant 0 : index
    %21 = vector.load %arg5[%c15, %c0_18] : memref<44x128xf32, #tpu.memory_space<vmem>>, vector<24x128xf32>
    %22 = arith.addf %20, %21 : vector<24x128xf32>
    %c20 = arith.constant 20 : index
    %c0_19 = arith.constant 0 : index
    %23 = vector.load %arg5[%c20, %c0_19] : memref<44x128xf32, #tpu.memory_space<vmem>>, vector<24x128xf32>
    %24 = arith.addf %22, %23 : vector<24x128xf32>
    %cst_20 = arith.constant 4.000000e-02 : f32
    %25 = vector.broadcast %cst_20 : f32 to vector<24x128xf32>
    %26 = arith.mulf %24, %25 : vector<24x128xf32>
    %c0_21 = arith.constant 0 : index
    %c0_22 = arith.constant 0 : index
    %27 = vector.load %arg3[%c0_21, %c0_22] : memref<24x128xf32, #tpu.memory_space<vmem>>, vector<24x128xf32>
    tpu.vector_store %arg3[%c0_21, %c0_22], %26 {strides = array<i32>} : memref<24x128xf32, #tpu.memory_space<vmem>>, vector<24x128xf32>,
    %28 = arith.subf %0, %26 : vector<24x128xf32>
    %c0_23 = arith.constant 0 : index
    %c0_24 = arith.constant 0 : index
    %29 = vector.load %arg2[%c0_23, %c0_24] : memref<24x128xf32, #tpu.memory_space<vmem>>, vector<24x128xf32>
    tpu.vector_store %arg2[%c0_23, %c0_24], %28 {strides = array<i32>} : memref<24x128xf32, #tpu.memory_space<vmem>>, vector<24x128xf32>,
    return
  }
  func.func @transform_0(%arg0: i32) -> (i32, i32) {
    %c0_i32 = arith.constant 0 : i32
    %c0_i32_0 = arith.constant 0 : i32
    return %c0_i32, %arg0 : i32, i32
  }
  func.func @transform_1(%arg0: i32) -> (i32, i32) {
    %c0_i32 = arith.constant 0 : i32
    %c0_i32_0 = arith.constant 0 : i32
    return %c0_i32, %arg0 : i32, i32
  }
  func.func @transform_2(%arg0: i32) -> (i32, i32) {
    %c0_i32 = arith.constant 0 : i32
    %c0_i32_0 = arith.constant 0 : i32
    return %c0_i32, %arg0 : i32, i32
  }
}

</mosaic_0001>

<llo_original>
// kernel: tpu_custom_call.1
$region0: #{tpu_custom_call.1}
  #allocation0 [shape = 'u32[]', space=smem, size = 0x4, offset = 0x4, fixed_abs, tag = 'smem constant byte address 0x4 - core index']
  #allocation1 [shape = 'u32[144,128]{1,0:T(1,128)}', space=vmem, size = 0x12000, scoped, tag = 'internal scratch']
  #allocation2 [shape = 'f32[56,128]{1,0:T(8,128)}', space=vmem, size = 0x7000, scoped, tag = 'scratch operand']
  #allocation3 [shape = 'f32[44,128]{1,0:T(8,128)}', space=vmem, size = 0x6000, scoped, tag = 'scratch operand']
  %s0 = inlined_call_operand.hbm [shape: f32[24,128], index: 0, kind: input, shape index: {}]
  %s1 = inlined_call_operand.hbm [shape: f32[24,128], index: 1, kind: output, shape index: {0}]
  %s2 = inlined_call_operand.hbm [shape: f32[24,128], index: 2, kind: output, shape index: {1}]
  %3 = xla_tuple %s1, %s2
  %s4 = sld [smem:[#allocation0]]
  $region26: #{tpu_custom_call.1} parent=0
    _
  %s6 = ssub.s32 1, %s4
  %s7 = scalar_select 0, %s6, %s4
  $region1: #{tpu_custom_call.1} parent=0
    #allocation4 [shape = 'u8[12288]{0}', space=vmem, size = 0x3000, scoped, tag = 'input window, operand 0, single buffered']
    #allocation5 [shape = 's32[1]{0}', space=sflag, size = 0x4, scoped, tag = 'scoped memory for tpu_custom_call.1']
    #allocation6 [shape = 's32[1]{0}', space=sflag, size = 0x4, scoped, tag = 'scoped memory for tpu_custom_call.1']
    #allocation7 [shape = 'u8[12288]{0}', space=vmem, size = 0x3000, scoped, tag = 'output window, operand 0, single buffered']
    #allocation8 [shape = 'u8[12288]{0}', space=vmem, size = 0x3000, scoped, tag = 'output window, operand 1, single buffered']
    #allocation9 [shape = 's32[1]{0}', space=sflag, size = 0x4, scoped, tag = 'scoped memory for tpu_custom_call.1']
    %8 = vsyncpa [#allocation5], 0
    %9 = vsyncpa [#allocation6], 0
    %10 = vsyncpa [#allocation9], 0
    // Predicated region
    $region2: #{tpu_custom_call.1} parent=1 // pred_check
      _
    $region3: #{tpu_custom_call.1} parent=1 // pred_check_branch
      %12 = sbr.rel (0) target = $region5
    $region4: #{tpu_custom_call.1} parent=1 // pred_region
      %s14 = ssub.s32 384, 384
      %15 = vsyncadd [#allocation5], %s14
      %s16 = sshll.u32 [#allocation4], 4
      %s17 = int_to_ptr.vmem [resolvable:$true] %s16
      %22 = dma.hbm_to_vmem [thread:$0]  %s0, 384, %s17, [#allocation5], 128, 128, 8
    $region5: #{tpu_custom_call.1} parent=1 // pred_fallthru
      _
    // Predicated region
    $region6: #{tpu_custom_call.1} parent=1 // pred_check
      _
    $region7: #{tpu_custom_call.1} parent=1 // pred_check_branch
      %24 = sbr.rel (0) target = $region9
    $region8: #{tpu_custom_call.1} parent=1 // pred_region
      %25 = dma.done [#allocation5], 384
    $region9: #{tpu_custom_call.1} parent=1 // pred_fallthru
      _
    %v26 = vld [vmem:[#allocation4] sm:$0xff]
    %v27 = vld [vmem:[#allocation4 + $0x8] sm:$0xff]
    %v28 = vld [vmem:[#allocation4 + $0x10] sm:$0xff]
    %29 = vst [vmem:[#allocation2] sm:$0xff] 0.0
    %30 = vst [vmem:[#allocation2 + $0x8] sm:$0xff] 0.0
    %31 = vst [vmem:[#allocation2 + $0x28] sm:$0xff] 0.0
    %32 = vst [vmem:[#allocation2 + $0x30] sm:$0xff] 0.0
    %33 = vst [vmem:[#allocation2 + $0x10] sm:$0xff] %v26
    %34 = vst [vmem:[#allocation2 + $0x18] sm:$0xff] %v27
    %35 = vst [vmem:[#allocation2 + $0x20] sm:$0xff] %v28
    %v36 = vld [vmem:[#allocation2 + $0x4] sm:$0xff]
    %v37 = vld [vmem:[#allocation2 + $0xc] sm:$0xff]
    %v38 = vld [vmem:[#allocation2 + $0x14] sm:$0xff]
    %v39 = vld [vmem:[#allocation2 + $0x1c] sm:$0xff]
    %v40 = vld [vmem:[#allocation2 + $0x24] sm:$0xff]
    %v41 = vld [vmem:[#allocation2 + $0x2c] sm:$0xf]
    %v42 = vld [vmem:[#allocation2 + $0x5] sm:$0xff]
    %v43 = vld [vmem:[#allocation2 + $0xd] sm:$0xff]
    %v44 = vld [vmem:[#allocation2 + $0x15] sm:$0xff]
    %v45 = vld [vmem:[#allocation2 + $0x1d] sm:$0xff]
    %v46 = vld [vmem:[#allocation2 + $0x25] sm:$0xff]
    %v47 = vld [vmem:[#allocation2 + $0x2d] sm:$0xf]
    %v48 = vadd.f32 %v36, %v42
    %v49 = vadd.f32 %v37, %v43
    %v50 = vadd.f32 %v38, %v44
    %v51 = vadd.f32 %v39, %v45
    %v52 = vadd.f32 %v40, %v46
    %v53 = vadd.f32 %v41, %v47
    %v54 = vld [vmem:[#allocation2 + $0x6] sm:$0xff]
    %v55 = vld [vmem:[#allocation2 + $0xe] sm:$0xff]
    %v56 = vld [vmem:[#allocation2 + $0x16] sm:$0xff]
    %v57 = vld [vmem:[#allocation2 + $0x1e] sm:$0xff]
    %v58 = vld [vmem:[#allocation2 + $0x26] sm:$0xff]
    %v59 = vld [vmem:[#allocation2 + $0x2e] sm:$0xf]
    %v60 = vadd.f32 %v48, %v54
    %v61 = vadd.f32 %v49, %v55
    %v62 = vadd.f32 %v50, %v56
    %v63 = vadd.f32 %v51, %v57
    %v64 = vadd.f32 %v52, %v58
    %v65 = vadd.f32 %v53, %v59
    %v66 = vld [vmem:[#allocation2 + $0x7] sm:$0xff]
    %v67 = vld [vmem:[#allocation2 + $0xf] sm:$0xff]
    %v68 = vld [vmem:[#allocation2 + $0x17] sm:$0xff]
    %v69 = vld [vmem:[#allocation2 + $0x1f] sm:$0xff]
    %v70 = vld [vmem:[#allocation2 + $0x27] sm:$0xff]
    %v71 = vld [vmem:[#allocation2 + $0x2f] sm:$0xf]
    %v72 = vadd.f32 %v60, %v66
    %v73 = vadd.f32 %v61, %v67
    %v74 = vadd.f32 %v62, %v68
    %v75 = vadd.f32 %v63, %v69
    %v76 = vadd.f32 %v64, %v70
    %v77 = vadd.f32 %v65, %v71
    %v78 = vld [vmem:[#allocation2 + $0x8] sm:$0xff]
    %v79 = vld [vmem:[#allocation2 + $0x10] sm:$0xff]
    %v80 = vld [vmem:[#allocation2 + $0x18] sm:$0xff]
    %v81 = vld [vmem:[#allocation2 + $0x20] sm:$0xff]
    %v82 = vld [vmem:[#allocation2 + $0x28] sm:$0xff]
    %v83 = vld [vmem:[#allocation2 + $0x30] sm:$0xf]
    %v84 = vadd.f32 %v72, %v78
    %v85 = vadd.f32 %v73, %v79
    %v86 = vadd.f32 %v74, %v80
    %v87 = vadd.f32 %v75, %v81
    %v88 = vadd.f32 %v76, %v82
    %v89 = vadd.f32 %v77, %v83
    %90 = vst [vmem:[#allocation3] sm:$0xff] %v84
    %91 = vst [vmem:[#allocation3 + $0x8] sm:$0xff] %v85
    %92 = vst [vmem:[#allocation3 + $0x10] sm:$0xff] %v86
    %93 = vst [vmem:[#allocation3 + $0x18] sm:$0xff] %v87
    %94 = vst [vmem:[#allocation3 + $0x20] sm:$0xff] %v88
    %95 = vst [vmem:[#allocation3 + $0x28] sm:$0xf] %v89
    %v96 = vld [vmem:[#allocation3] sm:$0xff]
    %v97 = vld [vmem:[#allocation3 + $0x8] sm:$0xff]
    %v98 = vld [vmem:[#allocation3 + $0x10] sm:$0xff]
    %v99 = vld [vmem:[#allocation3 + $0x5] sm:$0xff]
    %v100 = vld [vmem:[#allocation3 + $0xd] sm:$0xff]
    %v101 = vld [vmem:[#allocation3 + $0x15] sm:$0xff]
    %v102 = vadd.f32 %v96, %v99
    %v103 = vadd.f32 %v97, %v100
    %v104 = vadd.f32 %v98, %v101
    %v105 = vld [vmem:[#allocation3 + $0xa] sm:$0xff]
    %v106 = vld [vmem:[#allocation3 + $0x12] sm:$0xff]
    %v107 = vld [vmem:[#allocation3 + $0x1a] sm:$0xff]
    %v108 = vadd.f32 %v102, %v105
    %v109 = vadd.f32 %v103, %v106
    %v110 = vadd.f32 %v104, %v107
    %v111 = vld [vmem:[#allocation3 + $0xf] sm:$0xff]
    %v112 = vld [vmem:[#allocation3 + $0x17] sm:$0xff]
    %v113 = vld [vmem:[#allocation3 + $0x1f] sm:$0xff]
    %v114 = vadd.f32 %v108, %v111
    %v115 = vadd.f32 %v109, %v112
    %v116 = vadd.f32 %v110, %v113
    %v117 = vld [vmem:[#allocation3 + $0x14] sm:$0xff]
    %v118 = vld [vmem:[#allocation3 + $0x1c] sm:$0xff]
    %v119 = vld [vmem:[#allocation3 + $0x24] sm:$0xff]
    %v120 = vadd.f32 %v114, %v117
    %v121 = vadd.f32 %v115, %v118
    %v122 = vadd.f32 %v116, %v119
    %v123 = vmul.f32 %v120, 0.04
    %v124 = vmul.f32 %v121, 0.04
    %v125 = vmul.f32 %v122, 0.04
    %126 = vst [vmem:[#allocation8] sm:$0xff] %v123
    %127 = vst [vmem:[#allocation8 + $0x8] sm:$0xff] %v124
    %128 = vst [vmem:[#allocation8 + $0x10] sm:$0xff] %v125
    %v129 = vsub.f32 %v26, %v123
    %v130 = vsub.f32 %v27, %v124
    %v131 = vsub.f32 %v28, %v125
    %132 = vst [vmem:[#allocation7] sm:$0xff] %v129
    %133 = vst [vmem:[#allocation7 + $0x8] sm:$0xff] %v130
    %134 = vst [vmem:[#allocation7 + $0x10] sm:$0xff] %v131
    // Predicated region
    $region10: #{tpu_custom_call.1} parent=1 // pred_check
      _
    $region11: #{tpu_custom_call.1} parent=1 // pred_check_branch
      %136 = sbr.rel (0) target = $region13
    $region12: #{tpu_custom_call.1} parent=1 // pred_region
      %s138 = ssub.s32 384, 384
      %139 = vsyncadd [#allocation6], %s138
      %s140 = sshll.u32 [#allocation7], 4
      %s141 = int_to_ptr.vmem [resolvable:$true] %s140
      %146 = dma.vmem_to_hbm [thread:$0]  %s141, 384, %s1, [#allocation6], 128, 128, 8
    $region13: #{tpu_custom_call.1} parent=1 // pred_fallthru
      _
    // Predicated region
    $region14: #{tpu_custom_call.1} parent=1 // pred_check
      _
    $region15: #{tpu_custom_call.1} parent=1 // pred_check_branch
      %148 = sbr.rel (0) target = $region17
    $region16: #{tpu_custom_call.1} parent=1 // pred_region
      %s150 = ssub.s32 384, 384
      %151 = vsyncadd [#allocation9], %s150
      %s152 = sshll.u32 [#allocation8], 4
      %s153 = int_to_ptr.vmem [resolvable:$true] %s152
      %158 = dma.vmem_to_hbm [thread:$0]  %s153, 384, %s2, [#allocation9], 128, 128, 8
    $region17: #{tpu_custom_call.1} parent=1 // pred_fallthru
      _
    // Predicated region
    $region18: #{tpu_custom_call.1} parent=1 // pred_check
      _
    $region19: #{tpu_custom_call.1} parent=1 // pred_check_branch
      %160 = sbr.rel (0) target = $region21
    $region20: #{tpu_custom_call.1} parent=1 // pred_region
      %161 = dma.done [#allocation6], 384
    $region21: #{tpu_custom_call.1} parent=1 // pred_fallthru
      _
    // Predicated region
    $region22: #{tpu_custom_call.1} parent=1 // pred_check
      _
    $region23: #{tpu_custom_call.1} parent=1 // pred_check_branch
      %163 = sbr.rel (0) target = $region25
    $region24: #{tpu_custom_call.1} parent=1 // pred_region
      %164 = dma.done [#allocation9], 384
    $region25: #{tpu_custom_call.1} parent=1 // pred_fallthru
      _
    %165 = vsyncpa [#allocation5], 1
    %166 = vsyncpa [#allocation6], 1
    %167 = vsyncpa [#allocation9], 1

</llo_original>
